<compile_context>
chip_gen: v7x
topology: tpu7x:2x2x1
jax: 0.10.0
libtpu: 0.0.40
codegen_flags: <defaults>
</compile_context>

<pallas_src>
import functools
import math

import jax
import jax.numpy as jnp
from jax import lax
from jax.experimental import pallas as pl
from jax.experimental.pallas import tpu as pltpu

BN_EPS = 1e-5


def _bf16_vpu_available():
    """v6e/v7x have a bf16 VALU; v5e does not (a bf16 epilogue would decompose)."""
    try:
        kind = jax.devices()[0].device_kind.lower()
    except Exception:
        return True
    return "v5" not in kind


def _make_mlp_kernel(layer_cfgs, inv_n, lane_major):
    """Fused MLP kernel body.

    layer_cfgs: tuple of (has_bn, has_relu, epilogue_dtype) per layer (static).
    inv_n:      1.0 / N (compile-time constant, N = number of rows).
    lane_major: if True, activations live as (F, N) with N on the lane axis.

    Ref order: x, then per layer:
        w                    (F_out, F_in)               bf16
        gamma, beta (if bn)  (F_out, 1) or (1, F_out)    f32
        b           (if !bn) (F_out, 1) or (1, F_out)    f32
    followed by out_ref ((F_last, N) if lane_major else (N, F_last)).
    """
    red_axis = 1 if lane_major else 0

    def kernel(*refs):
        x_ref = refs[0]
        out_ref = refs[-1]
        param_refs = refs[1:-1]

        h = x_ref[...]                           # (N, F0), input dtype
        p = 0
        for idx, (has_bn, has_relu, epi_dtype) in enumerate(layer_cfgs):
            w = param_refs[p][...]               # (F_out, F_in) bf16
            p += 1
            hb = h.astype(jnp.bfloat16)          # no-op when h is already bf16
            if lane_major:
                if idx == 0:
                    # x arrives row-major (N, F0): contract its feature axis
                    # directly (W @ x^T) -- no transpose ever materialized.
                    y = lax.dot_general(w, hb, (((1,), (1,)), ((), ())),
                                        preferred_element_type=jnp.float32)
                else:
                    # (F_out, F_in) @ (F_in, N) -> (F_out, N), N dense in lanes.
                    y = lax.dot_general(w, hb, (((1,), (0,)), ((), ())),
                                        preferred_element_type=jnp.float32)
            else:
                # (N, F_in) . (F_out, F_in)^T -> (N, F_out)
                y = lax.dot_general(hb, w, (((1,), (1,)), ((), ())),
                                    preferred_element_type=jnp.float32)

            if has_bn:
                gamma = param_refs[p][...]
                beta = param_refs[p + 1][...]
                p += 2
                # Single-pass batch stats in f32 (training mode, biased var).
                # Linear bias is constant per feature -> cancelled by the mean
                # subtraction, so it is never added on BN layers.
                s = jnp.sum(y, axis=red_axis, keepdims=True)
                sq = jnp.sum(y * y, axis=red_axis, keepdims=True)
                mean = s * inv_n
                var = jnp.maximum(sq * inv_n - mean * mean, 0.0)
                # Fold the BN affine into per-feature scale/shift (F-sized
                # vectors: ~N x cheaper than per-element gamma/beta passes).
                scale = gamma * lax.rsqrt(var + BN_EPS)
                shift = beta - mean * scale
                y = y.astype(epi_dtype)
                y = y * scale.astype(epi_dtype) + shift.astype(epi_dtype)
            else:
                b = param_refs[p][...]
                p += 1
                y = (y + b).astype(epi_dtype)

            if has_relu:
                y = jnp.maximum(y, 0.0)
            h = y

        out_ref[...] = h.astype(out_ref.dtype)

    return kernel


def mlp_forward(x, params, *, batchnorm=True, last_activation=True,
                out_dtype=jnp.float32, lane_major=None):
    """MLP.forward.

    x:      (..., F0) input (leading dims flattened for the BN statistics,
            matching the PyTorch BatchNorm helper).
    params: list of (w, b, gamma, beta) with
              w     (F_out, F_in)  bf16  (PyTorch Linear layout, pre-cast)
              b     (F_out,)       f32
              gamma (F_out,)       f32
              beta  (F_out,)       f32
    """
    orig_shape = x.shape
    f0 = orig_shape[-1]
    x2 = x.reshape(-1, f0)
    n = x2.shape[0]
    n_layers = len(params)
    f_last = params[-1][0].shape[0]

    if lane_major is None:
        # Lane-dense layout pays off once the row count fills the 128-wide
        # lane axis (PointNet-scale point counts); tiny problems stay row-major.
        lane_major = (n >= 128) and (n % 128 == 0)

    use_bf16_epi = _bf16_vpu_available()
    layer_cfgs = []
    for i in range(n_layers):
        act = (i < n_layers - 1) or last_activation
        has_bn = batchnorm and act
        # bf16 epilogue only where it feeds another matmul; last layer in f32.
        epi = jnp.bfloat16 if (use_bf16_epi and i < n_layers - 1) else jnp.float32
        layer_cfgs.append((has_bn, act, epi))
    layer_cfgs = tuple(layer_cfgs)

    def vec(v):  # per-feature vector, oriented to match the chosen layout
        return v.reshape(-1, 1) if lane_major else v.reshape(1, -1)

    flat_args = [x2]
    flops = 0
    transcendentals = 0
    bytes_accessed = x2.size * x2.dtype.itemsize
    for (w, b, gamma, beta), (has_bn, _, _) in zip(params, layer_cfgs):
        f_out, f_in = w.shape
        flat_args.append(w)
        bytes_accessed += w.size * w.dtype.itemsize
        if has_bn:
            flat_args += [vec(gamma), vec(beta)]
            bytes_accessed += 2 * f_out * 4
            transcendentals += f_out            # one rsqrt per feature
        else:
            flat_args.append(vec(b))
            bytes_accessed += f_out * 4
        flops += 2 * n * f_in * f_out
    bytes_accessed += n * f_last * jnp.dtype(out_dtype).itemsize

    out_shape = (f_last, n) if lane_major else (n, f_last)
    vmem = pl.BlockSpec(memory_space=pltpu.MemorySpace.VMEM)

    out = pl.pallas_call(
        _make_mlp_kernel(layer_cfgs, 1.0 / float(n), lane_major),
        out_shape=jax.ShapeDtypeStruct(out_shape, out_dtype),
        in_specs=[vmem] * len(flat_args),
        out_specs=vmem,
        cost_estimate=pl.CostEstimate(flops=int(flops),
                                      transcendentals=int(transcendentals),
                                      bytes_accessed=int(bytes_accessed)),
    )(*flat_args)

    if lane_major:
        out = out.T          # wrapper-side layout plumbing (fuses under jit)
    return out.reshape(*orig_shape[:-1], f_last)


def init_mlp_params(key, hidden_size):
    """Deterministic params mirroring nn.Linear / nn.BatchNorm1d defaults,
    stored PRE-CAST so the forward wrapper never emits per-call dtype casts:
      w (F_out, F_in) bf16 (PyTorch layout), b / gamma / beta (F_out,) f32."""
    params = []
    for i in range(len(hidden_size) - 1):
        fin, fout = hidden_size[i], hidden_size[i + 1]
        key, kw, kb = jax.random.split(key, 3)
        bound = 1.0 / math.sqrt(fin)
        w = jax.random.uniform(kw, (fout, fin), jnp.float32, -bound, bound)
        b = jax.random.uniform(kb, (fout,), jnp.float32, -bound, bound)
        params.append((w.astype(jnp.bfloat16), b,
                       jnp.ones((fout,), jnp.float32),
                       jnp.zeros((fout,), jnp.float32)))
    return params


def mlp_reference(x, params, *, batchnorm=True, last_activation=True):
    """Pure-JAX f32 reference reproducing the PyTorch module (uses the same
    bf16-rounded weights, so only activation-path rounding differs)."""
    orig_shape = x.shape
    h = x.reshape(-1, orig_shape[-1]).astype(jnp.float32)
    n_layers = len(params)
    for i, (w, b, gamma, beta) in enumerate(params):
        h = h @ w.astype(jnp.float32).T + b[None, :]
        if (i < n_layers - 1) or last_activation:
            if batchnorm:
                mean = jnp.mean(h, axis=0, keepdims=True)
                var = jnp.mean(jnp.square(h - mean), axis=0, keepdims=True)
                h = (h - mean) * lax.rsqrt(var + BN_EPS)
                h = h * gamma[None, :] + beta[None, :]
            h = jnp.maximum(h, 0.0)
    return h.reshape(*orig_shape[:-1], h.shape[-1])


if __name__ == "__main__":
    # MLP([16, 32, 64, 32]) on point-feature tensors, as in the source model.
    hidden_size = (16, 32, 64, 32)
    key = jax.random.PRNGKey(0)
    k_p, k_x0, k_x1 = jax.random.split(key, 3)
    params = init_mlp_params(k_p, hidden_size)

    fwd = jax.jit(functools.partial(mlp_forward, params=params))

    # Small demo shape (row-major path): (B, P, F0) = (2, 16, 16) -> N = 32.
    x_small = jax.random.normal(k_x0, (2, 16, hidden_size[0]), jnp.float32)
    y_small = jax.block_until_ready(fwd(x_small))
    assert y_small.shape == (2, 16, hidden_size[-1]), y_small.shape
    err_small = float(jnp.max(jnp.abs(y_small - mlp_reference(x_small, params))))

    # PointNet-scale point count (lane-dense path): N = 2048 rows on the lanes.
    x_big = jax.random.normal(k_x1, (2, 1024, hidden_size[0]), jnp.float32)
    y_big = jax.block_until_ready(fwd(x_big))
    assert y_big.shape == (2, 1024, hidden_size[-1]), y_big.shape
    err_big = float(jnp.max(jnp.abs(y_big - mlp_reference(x_big, params))))

    assert bool(jnp.all(jnp.isfinite(y_small))), "non-finite output (small)"
    assert bool(jnp.all(jnp.isfinite(y_big))), "non-finite output (large)"
    assert err_small < 0.25 and err_big < 0.25, (err_small, err_big)
    print("KERNEL_OK")
</pallas_src>

<mosaic_0001>
module attributes {stable_mosaic.version = 11 : i64} {
  func.func @kernel(%arg0: memref<32x16xf32, #tpu.memory_space<vmem>>, %arg1: memref<32x16xbf16, #tpu.memory_space<vmem>>, %arg2: memref<1x32xf32, #tpu.memory_space<vmem>>, %arg3: memref<1x32xf32, #tpu.memory_space<vmem>>, %arg4: memref<64x32xbf16, #tpu.memory_space<vmem>>, %arg5: memref<1x64xf32, #tpu.memory_space<vmem>>, %arg6: memref<1x64xf32, #tpu.memory_space<vmem>>, %arg7: memref<32x64xbf16, #tpu.memory_space<vmem>>, %arg8: memref<1x32xf32, #tpu.memory_space<vmem>>, %arg9: memref<1x32xf32, #tpu.memory_space<vmem>>, %arg10: memref<32x32xf32, #tpu.memory_space<vmem>>) attributes {dimension_semantics = [], scalar_prefetch = 0 : i64, scratch_operands = 0 : i64, tpu.core_type = #tpu.core_type<tc>} {
    %c0 = arith.constant 0 : index
    %c0_0 = arith.constant 0 : index
    %0 = vector.load %arg0[%c0, %c0_0] : memref<32x16xf32, #tpu.memory_space<vmem>>, vector<32x16xf32>
    %c0_1 = arith.constant 0 : index
    %c0_2 = arith.constant 0 : index
    %1 = vector.load %arg1[%c0_1, %c0_2] : memref<32x16xbf16, #tpu.memory_space<vmem>>, vector<32x16xbf16>
    %2 = arith.truncf %0 : vector<32x16xf32> to vector<32x16xbf16>
    %cst = arith.constant dense<0.000000e+00> : vector<32x32xf32>
    %3 = tpu.matmul %2, %1, %cst {dimension_numbers = #tpu.dot_dimension_numbers<[1], [1], [0], [0], [0, 0, 1, 0], [], []>} : vector<32x16xbf16>, vector<32x16xbf16>, vector<32x32xf32> -> vector<32x32xf32>
    %c0_3 = arith.constant 0 : index
    %c0_4 = arith.constant 0 : index
    %4 = vector.load %arg2[%c0_3, %c0_4] : memref<1x32xf32, #tpu.memory_space<vmem>>, vector<1x32xf32>
    %c0_5 = arith.constant 0 : index
    %c0_6 = arith.constant 0 : index
    %5 = vector.load %arg3[%c0_5, %c0_6] : memref<1x32xf32, #tpu.memory_space<vmem>>, vector<1x32xf32>
    %cst_7 = arith.constant dense<0.000000e+00> : vector<32xf32>
    %6 = vector.multi_reduction <add>, %3, %cst_7 [0] : vector<32x32xf32> to vector<32xf32>
    %7 = vector.shape_cast %6 : vector<32xf32> to vector<1x32xf32>
    %8 = arith.mulf %3, %3 : vector<32x32xf32>
    %cst_8 = arith.constant dense<0.000000e+00> : vector<32xf32>
    %9 = vector.multi_reduction <add>, %8, %cst_8 [0] : vector<32x32xf32> to vector<32xf32>
    %10 = vector.shape_cast %9 : vector<32xf32> to vector<1x32xf32>
    %cst_9 = arith.constant 3.125000e-02 : f32
    %11 = vector.broadcast %cst_9 : f32 to vector<1x32xf32>
    %12 = arith.mulf %7, %11 : vector<1x32xf32>
    %cst_10 = arith.constant 3.125000e-02 : f32
    %13 = vector.broadcast %cst_10 : f32 to vector<1x32xf32>
    %14 = arith.mulf %10, %13 : vector<1x32xf32>
    %15 = arith.mulf %12, %12 : vector<1x32xf32>
    %16 = arith.subf %14, %15 : vector<1x32xf32>
    %cst_11 = arith.constant 0.000000e+00 : f32
    %17 = vector.broadcast %cst_11 : f32 to vector<1x32xf32>
    %18 = arith.maximumf %16, %17 : vector<1x32xf32>
    %cst_12 = arith.constant 9.99999974E-6 : f32
    %19 = vector.broadcast %cst_12 : f32 to vector<1x32xf32>
    %20 = arith.addf %18, %19 : vector<1x32xf32>
    %21 = math.rsqrt %20 : vector<1x32xf32>
    %22 = arith.mulf %4, %21 : vector<1x32xf32>
    %23 = arith.mulf %12, %22 : vector<1x32xf32>
    %24 = arith.subf %5, %23 : vector<1x32xf32>
    %25 = arith.truncf %3 : vector<32x32xf32> to vector<32x32xbf16>
    %26 = arith.truncf %22 : vector<1x32xf32> to vector<1x32xbf16>
    %27 = vector.broadcast %26 : vector<1x32xbf16> to vector<32x32xbf16>
    %28 = arith.mulf %25, %27 : vector<32x32xbf16>
    %29 = arith.truncf %24 : vector<1x32xf32> to vector<1x32xbf16>
    %30 = vector.broadcast %29 : vector<1x32xbf16> to vector<32x32xbf16>
    %31 = arith.addf %28, %30 : vector<32x32xbf16>
    %cst_13 = arith.constant 0.000000e+00 : bf16
    %32 = vector.broadcast %cst_13 : bf16 to vector<32x32xbf16>
    %33 = arith.maximumf %31, %32 : vector<32x32xbf16>
    %c0_14 = arith.constant 0 : index
    %c0_15 = arith.constant 0 : index
    %34 = vector.load %arg4[%c0_14, %c0_15] : memref<64x32xbf16, #tpu.memory_space<vmem>>, vector<64x32xbf16>
    %cst_16 = arith.constant dense<0.000000e+00> : vector<32x64xf32>
    %35 = tpu.matmul %33, %34, %cst_16 {dimension_numbers = #tpu.dot_dimension_numbers<[1], [1], [0], [0], [0, 0, 1, 0], [], []>} : vector<32x32xbf16>, vector<64x32xbf16>, vector<32x64xf32> -> vector<32x64xf32>
    %c0_17 = arith.constant 0 : index
    %c0_18 = arith.constant 0 : index
    %36 = vector.load %arg5[%c0_17, %c0_18] : memref<1x64xf32, #tpu.memory_space<vmem>>, vector<1x64xf32>
    %c0_19 = arith.constant 0 : index
    %c0_20 = arith.constant 0 : index
    %37 = vector.load %arg6[%c0_19, %c0_20] : memref<1x64xf32, #tpu.memory_space<vmem>>, vector<1x64xf32>
    %cst_21 = arith.constant dense<0.000000e+00> : vector<64xf32>
    %38 = vector.multi_reduction <add>, %35, %cst_21 [0] : vector<32x64xf32> to vector<64xf32>
    %39 = vector.shape_cast %38 : vector<64xf32> to vector<1x64xf32>
    %40 = arith.mulf %35, %35 : vector<32x64xf32>
    %cst_22 = arith.constant dense<0.000000e+00> : vector<64xf32>
    %41 = vector.multi_reduction <add>, %40, %cst_22 [0] : vector<32x64xf32> to vector<64xf32>
    %42 = vector.shape_cast %41 : vector<64xf32> to vector<1x64xf32>
    %cst_23 = arith.constant 3.125000e-02 : f32
    %43 = vector.broadcast %cst_23 : f32 to vector<1x64xf32>
    %44 = arith.mulf %39, %43 : vector<1x64xf32>
    %cst_24 = arith.constant 3.125000e-02 : f32
    %45 = vector.broadcast %cst_24 : f32 to vector<1x64xf32>
    %46 = arith.mulf %42, %45 : vector<1x64xf32>
    %47 = arith.mulf %44, %44 : vector<1x64xf32>
    %48 = arith.subf %46, %47 : vector<1x64xf32>
    %cst_25 = arith.constant 0.000000e+00 : f32
    %49 = vector.broadcast %cst_25 : f32 to vector<1x64xf32>
    %50 = arith.maximumf %48, %49 : vector<1x64xf32>
    %cst_26 = arith.constant 9.99999974E-6 : f32
    %51 = vector.broadcast %cst_26 : f32 to vector<1x64xf32>
    %52 = arith.addf %50, %51 : vector<1x64xf32>
    %53 = math.rsqrt %52 : vector<1x64xf32>
    %54 = arith.mulf %36, %53 : vector<1x64xf32>
    %55 = arith.mulf %44, %54 : vector<1x64xf32>
    %56 = arith.subf %37, %55 : vector<1x64xf32>
    %57 = arith.truncf %35 : vector<32x64xf32> to vector<32x64xbf16>
    %58 = arith.truncf %54 : vector<1x64xf32> to vector<1x64xbf16>
    %59 = vector.broadcast %58 : vector<1x64xbf16> to vector<32x64xbf16>
    %60 = arith.mulf %57, %59 : vector<32x64xbf16>
    %61 = arith.truncf %56 : vector<1x64xf32> to vector<1x64xbf16>
    %62 = vector.broadcast %61 : vector<1x64xbf16> to vector<32x64xbf16>
    %63 = arith.addf %60, %62 : vector<32x64xbf16>
    %cst_27 = arith.constant 0.000000e+00 : bf16
    %64 = vector.broadcast %cst_27 : bf16 to vector<32x64xbf16>
    %65 = arith.maximumf %63, %64 : vector<32x64xbf16>
    %c0_28 = arith.constant 0 : index
    %c0_29 = arith.constant 0 : index
    %66 = vector.load %arg7[%c0_28, %c0_29] : memref<32x64xbf16, #tpu.memory_space<vmem>>, vector<32x64xbf16>
    %cst_30 = arith.constant dense<0.000000e+00> : vector<32x32xf32>
    %67 = tpu.matmul %65, %66, %cst_30 {dimension_numbers = #tpu.dot_dimension_numbers<[1], [1], [0], [0], [0, 0, 1, 0], [], []>} : vector<32x64xbf16>, vector<32x64xbf16>, vector<32x32xf32> -> vector<32x32xf32>
    %c0_31 = arith.constant 0 : index
    %c0_32 = arith.constant 0 : index
    %68 = vector.load %arg8[%c0_31, %c0_32] : memref<1x32xf32, #tpu.memory_space<vmem>>, vector<1x32xf32>
    %c0_33 = arith.constant 0 : index
    %c0_34 = arith.constant 0 : index
    %69 = vector.load %arg9[%c0_33, %c0_34] : memref<1x32xf32, #tpu.memory_space<vmem>>, vector<1x32xf32>
    %cst_35 = arith.constant dense<0.000000e+00> : vector<32xf32>
    %70 = vector.multi_reduction <add>, %67, %cst_35 [0] : vector<32x32xf32> to vector<32xf32>
    %71 = vector.shape_cast %70 : vector<32xf32> to vector<1x32xf32>
    %72 = arith.mulf %67, %67 : vector<32x32xf32>
    %cst_36 = arith.constant dense<0.000000e+00> : vector<32xf32>
    %73 = vector.multi_reduction <add>, %72, %cst_36 [0] : vector<32x32xf32> to vector<32xf32>
    %74 = vector.shape_cast %73 : vector<32xf32> to vector<1x32xf32>
    %cst_37 = arith.constant 3.125000e-02 : f32
    %75 = vector.broadcast %cst_37 : f32 to vector<1x32xf32>
    %76 = arith.mulf %71, %75 : vector<1x32xf32>
    %cst_38 = arith.constant 3.125000e-02 : f32
    %77 = vector.broadcast %cst_38 : f32 to vector<1x32xf32>
    %78 = arith.mulf %74, %77 : vector<1x32xf32>
    %79 = arith.mulf %76, %76 : vector<1x32xf32>
    %80 = arith.subf %78, %79 : vector<1x32xf32>
    %cst_39 = arith.constant 0.000000e+00 : f32
    %81 = vector.broadcast %cst_39 : f32 to vector<1x32xf32>
    %82 = arith.maximumf %80, %81 : vector<1x32xf32>
    %cst_40 = arith.constant 9.99999974E-6 : f32
    %83 = vector.broadcast %cst_40 : f32 to vector<1x32xf32>
    %84 = arith.addf %82, %83 : vector<1x32xf32>
    %85 = math.rsqrt %84 : vector<1x32xf32>
    %86 = arith.mulf %68, %85 : vector<1x32xf32>
    %87 = arith.mulf %76, %86 : vector<1x32xf32>
    %88 = arith.subf %69, %87 : vector<1x32xf32>
    %89 = vector.broadcast %86 : vector<1x32xf32> to vector<32x32xf32>
    %90 = arith.mulf %67, %89 : vector<32x32xf32>
    %91 = vector.broadcast %88 : vector<1x32xf32> to vector<32x32xf32>
    %92 = arith.addf %90, %91 : vector<32x32xf32>
    %cst_41 = arith.constant 0.000000e+00 : f32
    %93 = vector.broadcast %cst_41 : f32 to vector<32x32xf32>
    %94 = arith.maximumf %92, %93 : vector<32x32xf32>
    %c0_42 = arith.constant 0 : index
    %c0_43 = arith.constant 0 : index
    %95 = vector.load %arg10[%c0_42, %c0_43] : memref<32x32xf32, #tpu.memory_space<vmem>>, vector<32x32xf32>
    tpu.vector_store %arg10[%c0_42, %c0_43], %94 {strides = array<i32>} : memref<32x32xf32, #tpu.memory_space<vmem>>, vector<32x32xf32>,
    return
  }
}

</mosaic_0001>

<llo_original>
// kernel: mlp_forward.1
$region0: #{mlp_forward.1}
  #allocation0 [shape = 'u32[]', space=smem, size = 0x4, offset = 0x4, fixed_abs, tag = 'smem constant byte address 0x4 - core index']
  #allocation1 [shape = 'u32[144,128]{1,0:T(1,128)}', space=vmem, size = 0x12000, scoped, tag = 'internal scratch']
  %s0 = inlined_call_operand.hbm [shape: f32[32,16], index: 0, kind: input, shape index: {}]
  %s1 = inlined_call_operand.hbm [shape: bf16[32,16], index: 1, kind: input, shape index: {}]
  %s2 = inlined_call_operand.vmem [shape: f32[1,32], index: 2, kind: input, shape index: {}, may-alias: {2,8}]
  %s3 = inlined_call_operand.vmem [shape: f32[1,32], index: 3, kind: input, shape index: {}, may-alias: {3,9}]
  %s4 = inlined_call_operand.vmem [shape: bf16[64,32], index: 4, kind: input, shape index: {}]
  %s5 = inlined_call_operand.vmem [shape: f32[1,64], index: 5, kind: input, shape index: {}]
  %s6 = inlined_call_operand.vmem [shape: f32[1,64], index: 6, kind: input, shape index: {}]
  %s7 = inlined_call_operand.vmem [shape: bf16[32,64], index: 7, kind: input, shape index: {}]
  %s8 = inlined_call_operand.vmem [shape: f32[1,32], index: 8, kind: input, shape index: {}, may-alias: {2,8}]
  %s9 = inlined_call_operand.vmem [shape: f32[1,32], index: 9, kind: input, shape index: {}, may-alias: {3,9}]
  %s10 = inlined_call_operand.hbm [shape: f32[32,32], index: 10, kind: output, shape index: {}]
  %s11 = sld [smem:[#allocation0]]
  $region58: #{mlp_forward.1} parent=0
    _
  %s13 = ssub.s32 1, %s11
  %s14 = scalar_select 0, %s13, %s11
  $region1: #{mlp_forward.1} parent=0
    #allocation2 [shape = 'u8[16384]{0}', space=vmem, size = 0x4000, scoped, tag = 'input window, operand 0, single buffered']
    #allocation3 [shape = 's32[1]{0}', space=sflag, size = 0x4, scoped, tag = 'scoped memory for mlp_forward.1']
    #allocation4 [shape = 's32[1]{0}', space=sflag, size = 0x4, scoped, tag = 'scoped memory for mlp_forward.1']
    #allocation5 [shape = 'u8[8192]{0}', space=vmem, size = 0x2000, scoped, tag = 'input window, operand 1, single buffered']
    #allocation6 [shape = 's32[1]{0}', space=sflag, size = 0x4, scoped, tag = 'scoped memory for mlp_forward.1']
    #allocation7 [shape = 'u8[16384]{0}', space=vmem, size = 0x4000, scoped, tag = 'output window, operand 0, single buffered']
    %15 = vsyncpa [#allocation3], 0
    %16 = vsyncpa [#allocation6], 0
    %17 = vsyncpa [#allocation4], 0
    // Predicated region
    $region2: #{mlp_forward.1} parent=1 // pred_check
      _
    $region3: #{mlp_forward.1} parent=1 // pred_check_branch
      %19 = sbr.rel (0) target = $region5
    $region4: #{mlp_forward.1} parent=1 // pred_region
      %s21 = ssub.s32 512, 512
      %22 = vsyncadd [#allocation3], %s21
      %s23 = sshll.u32 [#allocation2], 4
      %s24 = int_to_ptr.vmem [resolvable:$true] %s23
      %29 = dma.hbm_to_vmem [thread:$0]  %s0, 512, %s24, [#allocation3], 128, 128, 8
    $region5: #{mlp_forward.1} parent=1 // pred_fallthru
      _
    // Predicated region
    $region6: #{mlp_forward.1} parent=1 // pred_check
      _
    $region7: #{mlp_forward.1} parent=1 // pred_check_branch
      %31 = sbr.rel (0) target = $region9
    $region8: #{mlp_forward.1} parent=1 // pred_region
      %s33 = ssub.s32 256, 256
      %34 = vsyncadd [#allocation6], %s33
      %s35 = sshll.u32 [#allocation5], 4
      %s36 = int_to_ptr.vmem [resolvable:$true] %s35
      %41 = dma.hbm_to_vmem [thread:$0]  %s1, 256, %s36, [#allocation6], 64, 64, 4
    $region9: #{mlp_forward.1} parent=1 // pred_fallthru
      _
    // Predicated region
    $region10: #{mlp_forward.1} parent=1 // pred_check
      _
    $region11: #{mlp_forward.1} parent=1 // pred_check_branch
      %43 = sbr.rel (0) target = $region13
    $region12: #{mlp_forward.1} parent=1 // pred_region
      _
    $region13: #{mlp_forward.1} parent=1 // pred_fallthru
      _
    // Predicated region
    $region14: #{mlp_forward.1} parent=1 // pred_check
      _
    $region15: #{mlp_forward.1} parent=1 // pred_check_branch
      %45 = sbr.rel (0) target = $region17
    $region16: #{mlp_forward.1} parent=1 // pred_region
      _
    $region17: #{mlp_forward.1} parent=1 // pred_fallthru
      _
    // Predicated region
    $region18: #{mlp_forward.1} parent=1 // pred_check
      _
    $region19: #{mlp_forward.1} parent=1 // pred_check_branch
      %47 = sbr.rel (0) target = $region21
    $region20: #{mlp_forward.1} parent=1 // pred_region
      _
    $region21: #{mlp_forward.1} parent=1 // pred_fallthru
      _
    // Predicated region
    $region22: #{mlp_forward.1} parent=1 // pred_check
      _
    $region23: #{mlp_forward.1} parent=1 // pred_check_branch
      %49 = sbr.rel (0) target = $region25
    $region24: #{mlp_forward.1} parent=1 // pred_region
      _
    $region25: #{mlp_forward.1} parent=1 // pred_fallthru
      _
    // Predicated region
    $region26: #{mlp_forward.1} parent=1 // pred_check
      _
    $region27: #{mlp_forward.1} parent=1 // pred_check_branch
      %51 = sbr.rel (0) target = $region29
    $region28: #{mlp_forward.1} parent=1 // pred_region
      _
    $region29: #{mlp_forward.1} parent=1 // pred_fallthru
      _
    // Predicated region
    $region30: #{mlp_forward.1} parent=1 // pred_check
      _
    $region31: #{mlp_forward.1} parent=1 // pred_check_branch
      %53 = sbr.rel (0) target = $region33
    $region32: #{mlp_forward.1} parent=1 // pred_region
      _
    $region33: #{mlp_forward.1} parent=1 // pred_fallthru
      _
    // Predicated region
    $region34: #{mlp_forward.1} parent=1 // pred_check
      _
    $region35: #{mlp_forward.1} parent=1 // pred_check_branch
      %55 = sbr.rel (0) target = $region37
    $region36: #{mlp_forward.1} parent=1 // pred_region
      _
    $region37: #{mlp_forward.1} parent=1 // pred_fallthru
      _
    // Predicated region
    $region38: #{mlp_forward.1} parent=1 // pred_check
      _
    $region39: #{mlp_forward.1} parent=1 // pred_check_branch
      %57 = sbr.rel (0) target = $region41
    $region40: #{mlp_forward.1} parent=1 // pred_region
      _
    $region41: #{mlp_forward.1} parent=1 // pred_fallthru
      _
    // Predicated region
    $region42: #{mlp_forward.1} parent=1 // pred_check
      _
    $region43: #{mlp_forward.1} parent=1 // pred_check_branch
      %59 = sbr.rel (0) target = $region45
    $region44: #{mlp_forward.1} parent=1 // pred_region
      %60 = dma.done [#allocation3], 512
    $region45: #{mlp_forward.1} parent=1 // pred_fallthru
      _
    // Predicated region
    $region46: #{mlp_forward.1} parent=1 // pred_check
      _
    $region47: #{mlp_forward.1} parent=1 // pred_check_branch
      %62 = sbr.rel (0) target = $region49
    $region48: #{mlp_forward.1} parent=1 // pred_region
      %63 = dma.done [#allocation6], 256
    $region49: #{mlp_forward.1} parent=1 // pred_fallthru
      _
    %v65 = vld [vmem:[#allocation2] sm:$0xff]
    %v66 = vld [vmem:[#allocation2 + $0x8] sm:$0xff]
    %v67 = vld [vmem:[#allocation2 + $0x10] sm:$0xff]
    %v68 = vld [vmem:[#allocation2 + $0x18] sm:$0xff]
    %v69 = vld [vmem:[#allocation5] sm:$0xf]
    %v70 = vld [vmem:[#allocation5 + $0x4] sm:$0xf]
    %v71 = vld [vmem:[#allocation5 + $0x8] sm:$0xf]
    %v72 = vld [vmem:[#allocation5 + $0xc] sm:$0xf]
    %v73 = vpack.c.bf16 %v66, %v65
    %v74 = vpack.c.bf16 %v68, %v67
    %v79 = vunpack.c.l.b16 %v69
    %v80 = vunpack.c.l.b16 %v70
    %v81 = vunpack.c.l.b16 %v71
    %v82 = vunpack.c.l.b16 %v72
    %v83 = vpack.c.b16 %v80, %v79
    %v84 = vpack.c.b16 %v82, %v81
    %vm85 = vcmask 130048
    %v87 = vsel %vm85, %v73, 0
    %v90 = vsel %vm85, %v74, 0
    %v93 = vsel %vm85, %v83, 0
    %v96 = vsel %vm85, %v84, 0
    %98 = vmatprep.subr.bf16.mxu0 0
    %99 = vmatpush1.bf16.xpose.msra.mxu0 %v93
    %100 = vmatprep.subr.bf16.mxu0 0
    %101 = vmatpush1.bf16.xpose.msra.mxu0 %v96
    %102 = vmatprep.subr.bf16.mxu0 0
    %103 = vmatpush1.bf16.xpose.msra.mxu0 0
    %104 = vmatprep.subr.bf16.mxu0 0
    %105 = vmatpush1.bf16.xpose.msra.mxu0 0
    %106 = vmatprep.subr.bf16.mxu0 0
    %107 = vmatpush1.bf16.xpose.msra.mxu0 0
    %108 = vmatprep.subr.bf16.mxu0 0
    %109 = vmatpush1.bf16.xpose.msra.mxu0 0
    %110 = vmatprep.subr.bf16.mxu0 0
    %111 = vmatpush1.bf16.xpose.msra.mxu0 0
    %112 = vmatprep.subr.bf16.mxu0 0
    %113 = vmatpush1.bf16.xpose.msra.mxu0 0
    %114 = vmatprep.subr.bf16.mxu0 0
    %115 = vmatpush1.bf16.xpose.msra.mxu0 0
    %116 = vmatprep.subr.bf16.mxu0 0
    %117 = vmatpush1.bf16.xpose.msra.mxu0 0
    %118 = vmatprep.subr.bf16.mxu0 0
    %119 = vmatpush1.bf16.xpose.msra.mxu0 0
    %120 = vmatprep.subr.bf16.mxu0 0
    %121 = vmatpush1.bf16.xpose.msra.mxu0 0
    %122 = vmatprep.subr.bf16.mxu0 0
    %123 = vmatpush1.bf16.xpose.msra.mxu0 0
    %124 = vmatprep.subr.bf16.mxu0 0
    %125 = vmatpush1.bf16.xpose.msra.mxu0 0
    %126 = vmatprep.subr.bf16.mxu0 0
    %127 = vmatpush1.bf16.xpose.msra.mxu0 0
    %128 = vmatprep.subr.bf16.mxu0 0
    %129 = vmatpush1.bf16.xpose.msra.mxu0 0
    %130 = vmatprep.mubr.bf16.mxu0 0
    %131 = vmatmul.mubr.bf16.gmra.mrb[0].mxu0 %v87
    %v132 = vpop.f32.mrb[0].mxu0
    %v133 = vadd.f32 0.0, %v132
    %v134 = vpop.f32.mrb[0].mxu0
    %v135 = vpop.f32.mrb[0].mxu0
    %v136 = vadd.f32 0.0, %v135
    %v137 = vpop.f32.mrb[0].mxu0
    %138 = vmatprep.mubr.bf16.mxu0 0
    %139 = vmatmul.mubr.bf16.gmra.mrb[0].mxu0 %v90
    %v140 = vpop.f32.mrb[0].mxu0
    %v141 = vadd.f32 0.0, %v140
    %v142 = vpop.f32.mrb[0].mxu0
    %v143 = vpop.f32.mrb[0].mxu0
    %v144 = vadd.f32 0.0, %v143
    %v145 = vpop.f32.mrb[0].mxu0
    %146 = vdwg.mxu0
    %v147 = vld [vmem:[%s2] sm:$0x1]
    %v148 = vld [vmem:[%s3] sm:$0x1]
    %vm149 = vcmask 261120
    %v150 = vsel %vm149, %v133, 0.0
    %v151 = vsel %vm149, %v136, 0.0
    %v152 = vadd.f32 %v150, %v151
    %v153 = vsel %vm149, %v141, 0.0
    %v154 = vadd.f32 %v152, %v153
    %v155 = vsel %vm149, %v144, 0.0
    %v156 = vadd.f32 %v154, %v155
    %v157 = vrot.slane %v156, 4
    %v158 = vadd.f32 %v156, %v157
    %v159 = vrot.slane %v158, 2
    %v160 = vadd.f32 %v158, %v159
    %v161 = vrot.slane %v160, 1
    %v162 = vadd.f32 %v160, %v161
    %v163 = vmul.f32 %v133, %v133
    %v164 = vmul.f32 %v136, %v136
    %v165 = vmul.f32 %v141, %v141
    %v166 = vmul.f32 %v144, %v144
    %v167 = vsel %vm149, %v163, 0.0
    %v168 = vsel %vm149, %v164, 0.0
    %v169 = vadd.f32 %v167, %v168
    %v170 = vsel %vm149, %v165, 0.0
    %v171 = vadd.f32 %v169, %v170
    %v172 = vsel %vm149, %v166, 0.0
    %v173 = vadd.f32 %v171, %v172
    %v174 = vrot.slane %v173, 4
    %v175 = vadd.f32 %v173, %v174
    %v176 = vrot.slane %v175, 2
    %v177 = vadd.f32 %v175, %v176
    %v178 = vrot.slane %v177, 1
    %v179 = vadd.f32 %v177, %v178
    %v180 = vmul.f32 %v162, 0.03125
    %v181 = vmul.f32 %v179, 0.03125
    %v182 = vmul.f32 %v180, %v180
    %v183 = vsub.f32 %v181, %v182
    %v184 = vmax.f32 %v183, 0.0
    %v185 = vadd.f32 %v184, 1e-05
    %v186 = vrsqrt.pop %v185
    %v187 = vmul.f32 %v147, %v186
    %v188 = vmul.f32 %v180, %v187
    %v189 = vsub.f32 %v148, %v188
    %v190 = vpack.c.bf16 %v136, %v133
    %v191 = vpack.c.bf16 %v144, %v141
    %v192 = vpack.c.bf16 %v187, %v187
    %v194 = vpack.i.b16 %v192, %v192
    %v196 = vlaneseq
    %v197 = vshrl.u32 %v196, 7
    %v198 = vsub.s32 0, %v197
    %v199 = vrot.slane %v194, %v198
    %v200 = vmul.bf16 %v190, %v199
    %v201 = vmul.bf16 %v191, %v199
    %v202 = vpack.c.bf16 %v189, %v189
    %v204 = vpack.i.b16 %v202, %v202
    %v206 = vlaneseq
    %v207 = vshrl.u32 %v206, 7
    %v208 = vsub.s32 0, %v207
    %v209 = vrot.slane %v204, %v208
    %v210 = vadd.bf16 %v200, %v209
    %v211 = vadd.bf16 %v201, %v209
    %v212 = vmax.bf16 %v210, 0
    %v213 = vmax.bf16 %v211, 0
    %v214 = vld [vmem:[%s4] sm:$0xf]
    %v215 = vld [vmem:[%s4 + $0x4] sm:$0xf]
    %v216 = vld [vmem:[%s4 + $0x8] sm:$0xf]
    %v217 = vld [vmem:[%s4 + $0xc] sm:$0xf]
    %v218 = vld [vmem:[%s4 + $0x10] sm:$0xf]
    %v219 = vld [vmem:[%s4 + $0x14] sm:$0xf]
    %v220 = vld [vmem:[%s4 + $0x18] sm:$0xf]
    %v221 = vld [vmem:[%s4 + $0x1c] sm:$0xf]
    %v230 = vunpack.c.l.b16 %v214
    %v231 = vunpack.c.l.b16 %v215
    %v232 = vunpack.c.l.b16 %v216
    %v233 = vunpack.c.l.b16 %v217
    %v234 = vunpack.c.l.b16 %v218
    %v235 = vunpack.c.l.b16 %v219
    %v236 = vunpack.c.l.b16 %v220
    %v237 = vunpack.c.l.b16 %v221
    %v238 = vpack.c.b16 %v231, %v230
    %v239 = vpack.c.b16 %v233, %v232
    %v240 = vpack.c.b16 %v235, %v234
    %v241 = vpack.c.b16 %v237, %v236
    %v243 = vsel %vm149, %v212, 0
    %v246 = vsel %vm149, %v213, 0
    %v249 = vsel %vm149, %v238, 0
    %v252 = vsel %vm149, %v239, 0
    %v255 = vsel %vm149, %v240, 0
    %v258 = vsel %vm149, %v241, 0
    %260 = vmatprep.subr.bf16.mxu0 0
    %261 = vmatpush1.bf16.xpose.msra.mxu0 %v249
    %262 = vmatprep.subr.bf16.mxu0 0
    %263 = vmatpush1.bf16.xpose.msra.mxu0 %v252
    %264 = vmatprep.subr.bf16.mxu0 0
    %265 = vmatpush1.bf16.xpose.msra.mxu0 %v255
    %266 = vmatprep.subr.bf16.mxu0 0
    %267 = vmatpush1.bf16.xpose.msra.mxu0 %v258
    %268 = vmatprep.subr.bf16.mxu0 0
    %269 = vmatpush1.bf16.xpose.msra.mxu0 0
    %270 = vmatprep.subr.bf16.mxu0 0
    %271 = vmatpush1.bf16.xpose.msra.mxu0 0
    %272 = vmatprep.subr.bf16.mxu0 0
    %273 = vmatpush1.bf16.xpose.msra.mxu0 0
    %274 = vmatprep.subr.bf16.mxu0 0
    %275 = vmatpush1.bf16.xpose.msra.mxu0 0
    %276 = vmatprep.subr.bf16.mxu0 0
    %277 = vmatpush1.bf16.xpose.msra.mxu0 0
    %278 = vmatprep.subr.bf16.mxu0 0
    %279 = vmatpush1.bf16.xpose.msra.mxu0 0
    %280 = vmatprep.subr.bf16.mxu0 0
    %281 = vmatpush1.bf16.xpose.msra.mxu0 0
    %282 = vmatprep.subr.bf16.mxu0 0
    %283 = vmatpush1.bf16.xpose.msra.mxu0 0
    %284 = vmatprep.subr.bf16.mxu0 0
    %285 = vmatpush1.bf16.xpose.msra.mxu0 0
    %286 = vmatprep.subr.bf16.mxu0 0
    %287 = vmatpush1.bf16.xpose.msra.mxu0 0
    %288 = vmatprep.subr.bf16.mxu0 0
    %289 = vmatpush1.bf16.xpose.msra.mxu0 0
    %290 = vmatprep.subr.bf16.mxu0 0
    %291 = vmatpush1.bf16.xpose.msra.mxu0 0
    %292 = vmatprep.mubr.bf16.mxu0 0
    %293 = vmatmul.mubr.bf16.gmra.mrb[0].mxu0 %v243
    %v294 = vpop.f32.mrb[0].mxu0
    %v295 = vadd.f32 0.0, %v294
    %v296 = vpop.f32.mrb[0].mxu0
    %v297 = vpop.f32.mrb[0].mxu0
    %v298 = vadd.f32 0.0, %v297
    %v299 = vpop.f32.mrb[0].mxu0
    %300 = vmatprep.mubr.bf16.mxu0 0
    %301 = vmatmul.mubr.bf16.gmra.mrb[0].mxu0 %v246
    %v302 = vpop.f32.mrb[0].mxu0
    %v303 = vadd.f32 0.0, %v302
    %v304 = vpop.f32.mrb[0].mxu0
    %v305 = vpop.f32.mrb[0].mxu0
    %v306 = vadd.f32 0.0, %v305
    %v307 = vpop.f32.mrb[0].mxu0
    %308 = vdwg.mxu0
    %v309 = vld [vmem:[%s5] sm:$0x1]
    %v310 = vld [vmem:[%s6] sm:$0x1]
    %vm311 = vcmask 523264
    %v312 = vsel %vm311, %v295, 0.0
    %v313 = vsel %vm311, %v298, 0.0
    %v314 = vadd.f32 %v312, %v313
    %v315 = vsel %vm311, %v303, 0.0
    %v316 = vadd.f32 %v314, %v315
    %v317 = vsel %vm311, %v306, 0.0
    %v318 = vadd.f32 %v316, %v317
    %v319 = vrot.slane %v318, 4
    %v320 = vadd.f32 %v318, %v319
    %v321 = vrot.slane %v320, 2
    %v322 = vadd.f32 %v320, %v321
    %v323 = vrot.slane %v322, 1
    %v324 = vadd.f32 %v322, %v323
    %v325 = vmul.f32 %v295, %v295
    %v326 = vmul.f32 %v298, %v298
    %v327 = vmul.f32 %v303, %v303
    %v328 = vmul.f32 %v306, %v306
    %v329 = vsel %vm311, %v325, 0.0
    %v330 = vsel %vm311, %v326, 0.0
    %v331 = vadd.f32 %v329, %v330
    %v332 = vsel %vm311, %v327, 0.0
    %v333 = vadd.f32 %v331, %v332
    %v334 = vsel %vm311, %v328, 0.0
    %v335 = vadd.f32 %v333, %v334
    %v336 = vrot.slane %v335, 4
    %v337 = vadd.f32 %v335, %v336
    %v338 = vrot.slane %v337, 2
    %v339 = vadd.f32 %v337, %v338
    %v340 = vrot.slane %v339, 1
    %v341 = vadd.f32 %v339, %v340
    %v342 = vmul.f32 %v324, 0.03125
    %v343 = vmul.f32 %v341, 0.03125
    %v344 = vmul.f32 %v342, %v342
    %v345 = vsub.f32 %v343, %v344
    %v346 = vmax.f32 %v345, 0.0
    %v347 = vadd.f32 %v346, 1e-05
    %v348 = vrsqrt.pop %v347
    %v349 = vmul.f32 %v309, %v348
    %v350 = vmul.f32 %v342, %v349
    %v351 = vsub.f32 %v310, %v350
    %v352 = vpack.c.bf16 %v298, %v295
    %v353 = vpack.c.bf16 %v306, %v303
    %v354 = vpack.c.bf16 %v349, %v349
    %v356 = vpack.i.b16 %v354, %v354
    %v358 = vlaneseq
    %v359 = vshrl.u32 %v358, 7
    %v360 = vsub.s32 0, %v359
    %v361 = vrot.slane %v356, %v360
    %v362 = vmul.bf16 %v352, %v361
    %v363 = vmul.bf16 %v353, %v361
    %v364 = vpack.c.bf16 %v351, %v351
    %v366 = vpack.i.b16 %v364, %v364
    %v368 = vlaneseq
    %v369 = vshrl.u32 %v368, 7
    %v370 = vsub.s32 0, %v369
    %v371 = vrot.slane %v366, %v370
    %v372 = vadd.bf16 %v362, %v371
    %v373 = vadd.bf16 %v363, %v371
    %v374 = vmax.bf16 %v372, 0
    %v375 = vmax.bf16 %v373, 0
    %v376 = vld [vmem:[%s7] sm:$0xf]
    %v377 = vld [vmem:[%s7 + $0x4] sm:$0xf]
    %v378 = vld [vmem:[%s7 + $0x8] sm:$0xf]
    %v379 = vld [vmem:[%s7 + $0xc] sm:$0xf]
    %v384 = vunpack.c.l.b16 %v376
    %v385 = vunpack.c.l.b16 %v377
    %v386 = vunpack.c.l.b16 %v378
    %v387 = vunpack.c.l.b16 %v379
    %v388 = vpack.c.b16 %v385, %v384
    %v389 = vpack.c.b16 %v387, %v386
    %v391 = vsel %vm311, %v374, 0
    %v394 = vsel %vm311, %v375, 0
    %v397 = vsel %vm311, %v388, 0
    %v400 = vsel %vm311, %v389, 0
    %402 = vmatprep.subr.bf16.mxu0 0
    %403 = vmatpush1.bf16.xpose.msra.mxu0 %v397
    %404 = vmatprep.subr.bf16.mxu0 0
    %405 = vmatpush1.bf16.xpose.msra.mxu0 %v400
    %406 = vmatprep.subr.bf16.mxu0 0
    %407 = vmatpush1.bf16.xpose.msra.mxu0 0
    %408 = vmatprep.subr.bf16.mxu0 0
    %409 = vmatpush1.bf16.xpose.msra.mxu0 0
    %410 = vmatprep.subr.bf16.mxu0 0
    %411 = vmatpush1.bf16.xpose.msra.mxu0 0
    %412 = vmatprep.subr.bf16.mxu0 0
    %413 = vmatpush1.bf16.xpose.msra.mxu0 0
    %414 = vmatprep.subr.bf16.mxu0 0
    %415 = vmatpush1.bf16.xpose.msra.mxu0 0
    %416 = vmatprep.subr.bf16.mxu0 0
    %417 = vmatpush1.bf16.xpose.msra.mxu0 0
    %418 = vmatprep.subr.bf16.mxu0 0
    %419 = vmatpush1.bf16.xpose.msra.mxu0 0
    %420 = vmatprep.subr.bf16.mxu0 0
    %421 = vmatpush1.bf16.xpose.msra.mxu0 0
    %422 = vmatprep.subr.bf16.mxu0 0
    %423 = vmatpush1.bf16.xpose.msra.mxu0 0
    %424 = vmatprep.subr.bf16.mxu0 0
    %425 = vmatpush1.bf16.xpose.msra.mxu0 0
    %426 = vmatprep.subr.bf16.mxu0 0
    %427 = vmatpush1.bf16.xpose.msra.mxu0 0
    %428 = vmatprep.subr.bf16.mxu0 0
    %429 = vmatpush1.bf16.xpose.msra.mxu0 0
    %430 = vmatprep.subr.bf16.mxu0 0
    %431 = vmatpush1.bf16.xpose.msra.mxu0 0
    %432 = vmatprep.subr.bf16.mxu0 0
    %433 = vmatpush1.bf16.xpose.msra.mxu0 0
    %434 = vmatprep.mubr.bf16.mxu0 0
    %435 = vmatmul.mubr.bf16.gmra.mrb[0].mxu0 %v391
    %v436 = vpop.f32.mrb[0].mxu0
    %v437 = vadd.f32 0.0, %v436
    %v438 = vpop.f32.mrb[0].mxu0
    %v439 = vpop.f32.mrb[0].mxu0
    %v440 = vadd.f32 0.0, %v439
    %v441 = vpop.f32.mrb[0].mxu0
    %442 = vmatprep.mubr.bf16.mxu0 0
    %443 = vmatmul.mubr.bf16.gmra.mrb[0].mxu0 %v394
    %v444 = vpop.f32.mrb[0].mxu0
    %v445 = vadd.f32 0.0, %v444
    %v446 = vpop.f32.mrb[0].mxu0
    %v447 = vpop.f32.mrb[0].mxu0
    %v448 = vadd.f32 0.0, %v447
    %v449 = vpop.f32.mrb[0].mxu0
    %450 = vdwg.mxu0
    %v451 = vld [vmem:[%s8] sm:$0x1]
    %v452 = vld [vmem:[%s9] sm:$0x1]
    %v453 = vsel %vm149, %v437, 0.0
    %v454 = vsel %vm149, %v440, 0.0
    %v455 = vadd.f32 %v453, %v454
    %v456 = vsel %vm149, %v445, 0.0
    %v457 = vadd.f32 %v455, %v456
    %v458 = vsel %vm149, %v448, 0.0
    %v459 = vadd.f32 %v457, %v458
    %v460 = vrot.slane %v459, 4
    %v461 = vadd.f32 %v459, %v460
    %v462 = vrot.slane %v461, 2
    %v463 = vadd.f32 %v461, %v462
    %v464 = vrot.slane %v463, 1
    %v465 = vadd.f32 %v463, %v464
    %v466 = vmul.f32 %v437, %v437
    %v467 = vmul.f32 %v440, %v440
    %v468 = vmul.f32 %v445, %v445
    %v469 = vmul.f32 %v448, %v448
    %v470 = vsel %vm149, %v466, 0.0
    %v471 = vsel %vm149, %v467, 0.0
    %v472 = vadd.f32 %v470, %v471
    %v473 = vsel %vm149, %v468, 0.0
    %v474 = vadd.f32 %v472, %v473
    %v475 = vsel %vm149, %v469, 0.0
    %v476 = vadd.f32 %v474, %v475
    %v477 = vrot.slane %v476, 4
    %v478 = vadd.f32 %v476, %v477
    %v479 = vrot.slane %v478, 2
    %v480 = vadd.f32 %v478, %v479
    %v481 = vrot.slane %v480, 1
    %v482 = vadd.f32 %v480, %v481
    %v483 = vmul.f32 %v465, 0.03125
    %v484 = vmul.f32 %v482, 0.03125
    %v485 = vmul.f32 %v483, %v483
    %v486 = vsub.f32 %v484, %v485
    %v487 = vmax.f32 %v486, 0.0
    %v488 = vadd.f32 %v487, 1e-05
    %v489 = vrsqrt.pop %v488
    %v490 = vmul.f32 %v451, %v489
    %v491 = vmul.f32 %v483, %v490
    %v492 = vsub.f32 %v452, %v491
    %v494 = vlaneseq
    %v495 = vshrl.u32 %v494, 7
    %v496 = vsub.s32 0, %v495
    %v497 = vrot.slane %v490, %v496
    %v499 = vmul.f32 %v437, %v497
    %v500 = vmul.f32 %v440, %v497
    %v501 = vmul.f32 %v445, %v497
    %v502 = vmul.f32 %v448, %v497
    %v504 = vlaneseq
    %v505 = vshrl.u32 %v504, 7
    %v506 = vsub.s32 0, %v505
    %v507 = vrot.slane %v492, %v506
    %v509 = vadd.f32 %v499, %v507
    %v510 = vadd.f32 %v500, %v507
    %v511 = vadd.f32 %v501, %v507
    %v512 = vadd.f32 %v502, %v507
    %v513 = vmax.f32 %v509, 0.0
    %v514 = vmax.f32 %v510, 0.0
    %v515 = vmax.f32 %v511, 0.0
    %v516 = vmax.f32 %v512, 0.0
    %517 = vst.msk [vmem:[#allocation7] sm:$0xff] %vm149, %v513
    %518 = vst.msk [vmem:[#allocation7 + $0x8] sm:$0xff] %vm149, %v514
    %519 = vst.msk [vmem:[#allocation7 + $0x10] sm:$0xff] %vm149, %v515
    %520 = vst.msk [vmem:[#allocation7 + $0x18] sm:$0xff] %vm149, %v516
    // Predicated region
    $region50: #{mlp_forward.1} parent=1 // pred_check
      _
    $region51: #{mlp_forward.1} parent=1 // pred_check_branch
      %522 = sbr.rel (0) target = $region53
    $region52: #{mlp_forward.1} parent=1 // pred_region
      %s524 = ssub.s32 512, 512
      %525 = vsyncadd [#allocation4], %s524
      %s526 = sshll.u32 [#allocation7], 4
      %s527 = int_to_ptr.vmem [resolvable:$true] %s526
      %532 = dma.vmem_to_hbm [thread:$0]  %s527, 512, %s10, [#allocation4], 128, 128, 8
    $region53: #{mlp_forward.1} parent=1 // pred_fallthru
      _
    // Predicated region
    $region54: #{mlp_forward.1} parent=1 // pred_check
      _
    $region55: #{mlp_forward.1} parent=1 // pred_check_branch
      %534 = sbr.rel (0) target = $region57
    $region56: #{mlp_forward.1} parent=1 // pred_region
      %535 = dma.done [#allocation4], 512
    $region57: #{mlp_forward.1} parent=1 // pred_fallthru
      _
    %536 = vsyncpa [#allocation3], 1
    %537 = vsyncpa [#allocation6], 1
    %538 = vsyncpa [#allocation4], 1

</llo_original>
